<compile_context>
chip_gen: v7x
topology: tpu7x:2x2x1
jax: 0.10.0
libtpu: 0.0.40
codegen_flags: <defaults>
</compile_context>

<pallas_src>
import functools

import jax
import jax.numpy as jnp
from jax.experimental import pallas as pl
from jax.experimental.pallas import tpu as pltpu


def _kl_rows_kernel(t_ref, s_ref, row_ref, *, inv_temp):
    """Per-row KL sums for one (tile_n, C) tile.

    t_ref, s_ref : (tile_n, C) logits in the input dtype (VMEM)
    row_ref      : (tile_n, 1) f32 per-row sums  sum_j p_j*(log p_j - log q_j)
    """
    t = t_ref[...].astype(jnp.float32)
    s = s_ref[...].astype(jnp.float32)
    if inv_temp is not None:          # static: skipped entirely when T == 1.0
        t = t * inv_temp
        s = s * inv_temp
    # NOTE: the PyTorch module's `+ 1e-8` on the student logits is a no-op
    # under log_softmax shift-invariance, so it is dropped here.

    t_shift = t - jnp.max(t, axis=-1, keepdims=True)
    s_shift = s - jnp.max(s, axis=-1, keepdims=True)
    t_exp = jnp.exp(t_shift)
    s_exp = jnp.exp(s_shift)
    z_t = jnp.sum(t_exp, axis=-1, keepdims=True)   # teacher softmax denominator
    z_s = jnp.sum(s_exp, axis=-1, keepdims=True)   # student softmax denominator

    # sum_j p_j (log p_j - log q_j)
    #   = (1/z_t) * sum_j e^{t_shift_j} (t_shift_j - s_shift_j) + log z_s - log z_t
    w = jnp.sum(t_exp * (t_shift - s_shift), axis=-1, keepdims=True)
    # TODO(synk): if a bundle profile with bf16 inputs ever shows the 4 VALU
    # slots binding, offload the three row reductions above to the idle MXU
    # via jnp.dot with a (C, 128) ones constant (preferred_element_type=f32).
    row_ref[...] = w / z_t + jnp.log(z_s) - jnp.log(z_t)


def _tpu_budgets():
    """(per-tile f32 byte budget, scoped VMEM limit) — generation aware.

    Defaults are safe on v7x (64 MiB physical VMEM per TensorCore); promoted
    to larger budgets only when we positively detect >=100 MiB VMEM (v5e/v6e).
    """
    tile_budget, vmem_limit = 2 * 1024 * 1024, 32 * 1024 * 1024
    try:
        cap = int(pltpu.get_tpu_info().vmem_capacity_bytes)
        if cap >= 100 * 1024 * 1024:          # v5e / v6e: 128 MiB physical
            tile_budget, vmem_limit = 4 * 1024 * 1024, 64 * 1024 * 1024
    except Exception:
        pass
    return tile_budget, vmem_limit


def _pick_tile_n(n, c, tile_budget_bytes):
    """Largest batch tile (multiple of 8) whose (tile_n, C) f32 intermediate
    stays within the budget, capped so the grid keeps >= ~4 steps."""
    n_up = ((n + 7) // 8) * 8
    tile_n = tile_budget_bytes // (c * 4)
    tile_n = max(8, min(4096, (tile_n // 8) * 8))
    tile_n = min(tile_n, n_up)
    # Keep >= ~4 grid steps so (a) BlockSpec double-buffering overlaps DMA
    # with compute and (b) the "parallel" axis shards across v7x's 2 TCs.
    quarter = ((n_up // 4) // 8) * 8
    if quarter >= 8:
        tile_n = min(tile_n, quarter)
    return max(8, tile_n)


def kl_divergence(teacher_logit, student_logit, temperature=1.0, *,
                  tile_n=None, cast_inputs_to_bf16=False):
    """KL distillation loss matching the PyTorch KL_divergence module."""
    assert teacher_logit.shape == student_logit.shape
    assert teacher_logit.ndim == 2
    N, C = teacher_logit.shape
    T = float(temperature)

    if cast_inputs_to_bf16:
        # Halves HBM bytes on this bandwidth-bound kernel; math stays f32
        # inside the kernel. Callers storing distillation logits in bf16 get
        # this for free without the cast.
        teacher_logit = teacher_logit.astype(jnp.bfloat16)
        student_logit = student_logit.astype(jnp.bfloat16)

    tile_budget, vmem_limit = _tpu_budgets()
    if tile_n is None:
        tile_n = _pick_tile_n(N, C, tile_budget)
    assert tile_n % 8 == 0 and tile_n > 0

    # No jnp.pad: the last grid step may be ragged. Pallas masks the OOB
    # output rows, and any garbage in the padded input rows stays confined to
    # those rows because every reduction in the kernel is strictly per-row.
    grid = (pl.cdiv(N, tile_n),)

    inv_temp = None if T == 1.0 else 1.0 / T
    kernel = functools.partial(_kl_rows_kernel, inv_temp=inv_temp)

    row_sums = pl.pallas_call(
        kernel,
        out_shape=jax.ShapeDtypeStruct((N, 1), jnp.float32),
        grid_spec=pltpu.PrefetchScalarGridSpec(
            num_scalar_prefetch=0,
            grid=grid,
            in_specs=[
                pl.BlockSpec((tile_n, C), lambda i: (i, 0)),
                pl.BlockSpec((tile_n, C), lambda i: (i, 0)),
            ],
            out_specs=pl.BlockSpec((tile_n, 1), lambda i: (i, 0)),
        ),
        compiler_params=pltpu.CompilerParams(
            dimension_semantics=("parallel",),
            vmem_limit_bytes=vmem_limit,
        ),
    )(teacher_logit, student_logit)

    # 'mean' reduction (divide by the full element count N*C) and * T * T.
    return (jnp.sum(row_sums) / (N * C)) * T * T


def _reference(teacher, student, temp):
    p = jax.nn.softmax(teacher / temp, axis=1)
    log_q = jax.nn.log_softmax(student / temp + 1e-08, axis=1)
    return jnp.mean(p * (jnp.log(p) - log_q)) * temp * temp


if __name__ == "__main__":
    key = jax.random.PRNGKey(0)
    k1, k2 = jax.random.split(key)

    # Small shapes; batch deliberately NOT a multiple of the tile so the
    # ragged-last-block (no-pad) path is exercised: batch=36, classes=128.
    N, C, T = 36, 128, 2.0
    teacher = jax.random.normal(k1, (N, C), dtype=jnp.float32)
    student = jax.random.normal(k2, (N, C), dtype=jnp.float32)

    # Explicit small tile -> grid=(5,), last block ragged (rows 32..35 valid).
    loss = kl_divergence(teacher, student, temperature=T, tile_n=8)
    jax.block_until_ready(loss)
    ref = _reference(teacher, student, T)
    assert jnp.allclose(loss, ref, rtol=1e-4, atol=1e-6), (loss, ref)

    # Auto tile sizing + T == 1.0 fast path (no per-element scaling).
    loss1 = kl_divergence(teacher, student, temperature=1.0)
    jax.block_until_ready(loss1)
    ref1 = _reference(teacher, student, 1.0)
    assert jnp.allclose(loss1, ref1, rtol=1e-4, atol=1e-6), (loss1, ref1)

    # bf16 HBM inputs (half the DMA bytes), f32 math inside the kernel.
    loss_bf16 = kl_divergence(teacher, student, temperature=T,
                              cast_inputs_to_bf16=True)
    jax.block_until_ready(loss_bf16)
    t_bf = teacher.astype(jnp.bfloat16).astype(jnp.float32)
    s_bf = student.astype(jnp.bfloat16).astype(jnp.float32)
    ref_bf16 = _reference(t_bf, s_bf, T)
    assert jnp.allclose(loss_bf16, ref_bf16, rtol=1e-4, atol=1e-6), (loss_bf16, ref_bf16)

    print("KERNEL_OK")
</pallas_src>

<mosaic_0001>
module attributes {stable_mosaic.version = 11 : i64} {
  func.func @_kl_rows_kernel(%arg0: i32, %arg1: memref<8x128xf32, #tpu.memory_space<vmem>>, %arg2: memref<8x128xf32, #tpu.memory_space<vmem>>, %arg3: memref<8x1xf32, #tpu.memory_space<vmem>>) attributes {dimension_semantics = [#tpu.dimension_semantics<parallel>], iteration_bounds = array<i64: 5>, scalar_prefetch = 0 : i64, scratch_operands = 0 : i64, tpu.core_type = #tpu.core_type<tc>, window_params = [{transform_indices = @transform_0, window_bounds = array<i64: 8, 128>}, {transform_indices = @transform_1, window_bounds = array<i64: 8, 128>}, {transform_indices = @transform_2, window_bounds = array<i64: 8, 1>}]} {
    %c0 = arith.constant 0 : index
    %c0_0 = arith.constant 0 : index
    %0 = vector.load %arg1[%c0, %c0_0] : memref<8x128xf32, #tpu.memory_space<vmem>>, vector<8x128xf32>
    %c0_1 = arith.constant 0 : index
    %c0_2 = arith.constant 0 : index
    %1 = vector.load %arg2[%c0_1, %c0_2] : memref<8x128xf32, #tpu.memory_space<vmem>>, vector<8x128xf32>
    %cst = arith.constant 5.000000e-01 : f32
    %2 = vector.broadcast %cst : f32 to vector<8x128xf32>
    %3 = arith.mulf %0, %2 : vector<8x128xf32>
    %cst_3 = arith.constant 5.000000e-01 : f32
    %4 = vector.broadcast %cst_3 : f32 to vector<8x128xf32>
    %5 = arith.mulf %1, %4 : vector<8x128xf32>
    %cst_4 = arith.constant dense<0xFF800000> : vector<8xf32>
    %6 = vector.multi_reduction <maximumf>, %3, %cst_4 [1] : vector<8x128xf32> to vector<8xf32>
    %7 = vector.shape_cast %6 : vector<8xf32> to vector<8x1xf32>
    %8 = vector.broadcast %7 : vector<8x1xf32> to vector<8x128xf32>
    %9 = arith.subf %3, %8 : vector<8x128xf32>
    %cst_5 = arith.constant dense<0xFF800000> : vector<8xf32>
    %10 = vector.multi_reduction <maximumf>, %5, %cst_5 [1] : vector<8x128xf32> to vector<8xf32>
    %11 = vector.shape_cast %10 : vector<8xf32> to vector<8x1xf32>
    %12 = vector.broadcast %11 : vector<8x1xf32> to vector<8x128xf32>
    %13 = arith.subf %5, %12 : vector<8x128xf32>
    %14 = math.exp %9 : vector<8x128xf32>
    %15 = math.exp %13 : vector<8x128xf32>
    %cst_6 = arith.constant dense<0.000000e+00> : vector<8xf32>
    %16 = vector.multi_reduction <add>, %14, %cst_6 [1] : vector<8x128xf32> to vector<8xf32>
    %17 = vector.shape_cast %16 : vector<8xf32> to vector<8x1xf32>
    %cst_7 = arith.constant dense<0.000000e+00> : vector<8xf32>
    %18 = vector.multi_reduction <add>, %15, %cst_7 [1] : vector<8x128xf32> to vector<8xf32>
    %19 = vector.shape_cast %18 : vector<8xf32> to vector<8x1xf32>
    %20 = arith.subf %9, %13 : vector<8x128xf32>
    %21 = arith.mulf %14, %20 : vector<8x128xf32>
    %cst_8 = arith.constant dense<0.000000e+00> : vector<8xf32>
    %22 = vector.multi_reduction <add>, %21, %cst_8 [1] : vector<8x128xf32> to vector<8xf32>
    %23 = vector.shape_cast %22 : vector<8xf32> to vector<8x1xf32>
    %24 = arith.divf %23, %17 : vector<8x1xf32>
    %25 = math.log %19 : vector<8x1xf32>
    %26 = arith.addf %24, %25 : vector<8x1xf32>
    %27 = math.log %17 : vector<8x1xf32>
    %28 = arith.subf %26, %27 : vector<8x1xf32>
    %c0_9 = arith.constant 0 : index
    %c0_10 = arith.constant 0 : index
    %29 = vector.load %arg3[%c0_9, %c0_10] : memref<8x1xf32, #tpu.memory_space<vmem>>, vector<8x1xf32>
    tpu.vector_store %arg3[%c0_9, %c0_10], %28 {strides = array<i32>} : memref<8x1xf32, #tpu.memory_space<vmem>>, vector<8x1xf32>,
    return
  }
  func.func @transform_0(%arg0: i32) -> (i32, i32) {
    %c0_i32 = arith.constant 0 : i32
    %c0_i32_0 = arith.constant 0 : i32
    return %arg0, %c0_i32 : i32, i32
  }
  func.func @transform_1(%arg0: i32) -> (i32, i32) {
    %c0_i32 = arith.constant 0 : i32
    %c0_i32_0 = arith.constant 0 : i32
    return %arg0, %c0_i32 : i32, i32
  }
  func.func @transform_2(%arg0: i32) -> (i32, i32) {
    %c0_i32 = arith.constant 0 : i32
    %c0_i32_0 = arith.constant 0 : i32
    return %arg0, %c0_i32 : i32, i32
  }
}

</mosaic_0001>

<llo_original>
// kernel: tpu_custom_call.1
$region0: #{tpu_custom_call.1}
  #allocation0 [shape = 'u32[]', space=smem, size = 0x4, offset = 0x4, fixed_abs, tag = 'smem constant byte address 0x4 - core index']
  #allocation1 [shape = 'u32[144,128]{1,0:T(1,128)}', space=vmem, size = 0x12000, scoped, tag = 'internal scratch']
  %s0 = inlined_call_operand.hbm [shape: f32[36,128], index: 0, kind: input, shape index: {}]
  %s1 = inlined_call_operand.hbm [shape: f32[36,128], index: 1, kind: input, shape index: {}]
  %s2 = inlined_call_operand.vmem [shape: f32[36,1], index: 2, kind: output, shape index: {}]
  %s3 = sld [smem:[#allocation0]]
  $region49: #{tpu_custom_call.1} parent=0
    _
  %s5 = ssub.s32 1, %s3
  %s6 = scalar_select 0, %s5, %s3
  $region1: #{tpu_custom_call.1} parent=0
    #allocation2 [shape = 'u8[8192]{0}', space=vmem, size = 0x2000, scoped, tag = 'input window, operand 0']
    #allocation3 [shape = 's32[2]{0}', space=sflag, size = 0x8, scoped, tag = 'scoped memory for tpu_custom_call.1']
    #allocation4 [shape = 'u8[8192]{0}', space=vmem, size = 0x2000, scoped, tag = 'input window, operand 1']
    #allocation5 [shape = 's32[2]{0}', space=sflag, size = 0x8, scoped, tag = 'scoped memory for tpu_custom_call.1']
    %7 = vsyncpa [#allocation3], 0
    %s8 = scalar_lea.sflag [#allocation3], 1
    %9 = vsyncpa %s8, 0
    %10 = vsyncpa [#allocation5], 0
    %s11 = scalar_lea.sflag [#allocation5], 1
    %12 = vsyncpa %s11, 0
    loop: start=0, step=1, limit=7
    $region2: #{tpu_custom_call.1} parent=1 // loop_pre_header
      _
    $region3: #{tpu_custom_call.1} parent=1 // loop_header
      %s14 = sphi 0, %s18
      %p15 = scmp.ge.s32.totalorder %s14, 7
      %s24 = sphi 0, %s26
      %s27 = sphi 0, %s24
      %s28 = sphi 0, %s27
      %s44 = sphi 0, %s28
      %s50 = sphi 0, %s52
      %s53 = sphi 0, %s50
      %s54 = sphi 0, %s53
      %s70 = sphi 0, %s54
      %s76 = sphi 0, %s78
      %s79 = sphi 0, %s76
      %s80 = sphi 0, %s79
      %s96 = sphi 0, %s80
    $region4: #{tpu_custom_call.1} parent=1 // loop_header_branch
      %17 = sbr.rel (%p15) target = $region8
    $region5: #{tpu_custom_call.1} parent=1 // loop_body
      %s19 = ssub.s32 %s14, 1
      %s20 = ssub.s32 %s14, 2
      %s21 = sadd.s32 %s14, 1
      %s22 = ssub.s32 %s14, %s21
      %p23 = scmp.eq.s32.totalorder %s22, 0
      %s25 = sadd.s32 %s24, 1
      %s26 = scalar_select %p23, %s24, %s25
      %p29 = pneg %p23
      %p30 = scmp.eq.s32.totalorder %s14, 4
      %p31 = por %p29, %p30
      %p32 = scmp.ne.s32.totalorder %s24, %s27
      %p33 = scmp.eq.s32.totalorder %s14, 0
      %p34 = por %p32, %p33
      %p35 = scmp.ne.s32.totalorder %s24, %s27
      %p36 = scmp.eq.s32.totalorder %s19, 4
      %p37 = por %p35, %p36
      %p38 = scmp.ne.s32.totalorder %s27, %s28
      %p39 = scmp.eq.s32.totalorder %s19, 0
      %p40 = por %p38, %p39
      %p41 = scmp.ne.s32.totalorder %s27, %s28
      %p42 = scmp.eq.s32.totalorder %s20, 4
      %p43 = por %p41, %p42
      %p45 = scmp.ne.s32.totalorder %s28, %s44
      %p46 = scmp.eq.s32.totalorder %s20, 0
      %p47 = por %p45, %p46
      %s48 = ssub.s32 %s14, %s21
      %p49 = scmp.eq.s32.totalorder %s48, 0
      %s51 = sadd.s32 %s50, 1
      %s52 = scalar_select %p49, %s50, %s51
      %p55 = pneg %p49
      %p56 = scmp.eq.s32.totalorder %s14, 4
      %p57 = por %p55, %p56
      %p58 = scmp.ne.s32.totalorder %s50, %s53
      %p59 = scmp.eq.s32.totalorder %s14, 0
      %p60 = por %p58, %p59
      %p61 = scmp.ne.s32.totalorder %s50, %s53
      %p62 = scmp.eq.s32.totalorder %s19, 4
      %p63 = por %p61, %p62
      %p64 = scmp.ne.s32.totalorder %s53, %s54
      %p65 = scmp.eq.s32.totalorder %s19, 0
      %p66 = por %p64, %p65
      %p67 = scmp.ne.s32.totalorder %s53, %s54
      %p68 = scmp.eq.s32.totalorder %s20, 4
      %p69 = por %p67, %p68
      %p71 = scmp.ne.s32.totalorder %s54, %s70
      %p72 = scmp.eq.s32.totalorder %s20, 0
      %p73 = por %p71, %p72
      %s74 = ssub.s32 %s14, %s21
      %p75 = scmp.eq.s32.totalorder %s74, 0
      %s77 = sadd.s32 %s76, 1
      %s78 = scalar_select %p75, %s76, %s77
      %p81 = pneg %p75
      %p82 = scmp.eq.s32.totalorder %s14, 4
      %p83 = por %p81, %p82
      %p84 = scmp.ne.s32.totalorder %s76, %s79
      %p85 = scmp.eq.s32.totalorder %s14, 0
      %p86 = por %p84, %p85
      %p87 = scmp.ne.s32.totalorder %s76, %s79
      %p88 = scmp.eq.s32.totalorder %s19, 4
      %p89 = por %p87, %p88
      %p90 = scmp.ne.s32.totalorder %s79, %s80
      %p91 = scmp.eq.s32.totalorder %s19, 0
      %p92 = por %p90, %p91
      %p93 = scmp.ne.s32.totalorder %s79, %s80
      %p94 = scmp.eq.s32.totalorder %s20, 4
      %p95 = por %p93, %p94
      %p97 = scmp.ne.s32.totalorder %s80, %s96
      %p98 = scmp.eq.s32.totalorder %s20, 0
      %p99 = por %p97, %p98
      %p100 = scmp.le.s32.totalorder 1, %s14
      %p101 = scmp.lt.s32.totalorder %s14, 6
      %p102 = pnand %p100, %p101
      %p103 = pneg %p102
      // Predicated region
      $region9: #{tpu_custom_call.1} parent=5 // pred_check
        _
      $region10: #{tpu_custom_call.1} parent=5 // pred_check_branch
        %105 = sbr.rel (%p102) target = $region12
      $region11: #{tpu_custom_call.1} parent=5 // pred_region
        %s106 = ssub.s32 %s14, 1
      $region12: #{tpu_custom_call.1} parent=5 // pred_fallthru
        _
      %p107 = scmp.lt.s32.totalorder %s14, 5
      // Predicated region
      $region13: #{tpu_custom_call.1} parent=5 // pred_check
        %p108 = pneg %p107
      $region14: #{tpu_custom_call.1} parent=5 // pred_check_branch
        %110 = sbr.rel (%p108) target = $region16
      $region15: #{tpu_custom_call.1} parent=5 // pred_region
        // Predicated region
        $region17: #{tpu_custom_call.1} parent=15 // pred_check
          %p111 = pneg %p34
        $region18: #{tpu_custom_call.1} parent=15 // pred_check_branch
          %113 = sbr.rel (%p111) target = $region20
        $region19: #{tpu_custom_call.1} parent=15 // pred_region
          %s114 = sand.u32 %s24, 1
          %s115 = scalar_lea.sflag [#allocation3], %s114
          %s116 = sand.u32 %s24, 1
          %s117 = smul.addr %s116, 8
          %s118 = scalar_lea.vmem [#allocation2], %s117
          %s120 = ssub.s32 128, 128
          %121 = vsyncadd %s115, %s120
          %s122 = smul.addr %s14, 128
          %s123 = scalar_lea.hbm %s0, %s122
          %s125 = sshll.u32 %s118, 4
          %s126 = int_to_ptr.vmem [resolvable:$true] %s125
          %128 = dma.hbm_to_vmem [thread:$0]  %s123, 128, %s126, %s115
        $region20: #{tpu_custom_call.1} parent=15 // pred_fallthru
          _
        // Predicated region
        $region21: #{tpu_custom_call.1} parent=15 // pred_check
          %p129 = pneg %p60
        $region22: #{tpu_custom_call.1} parent=15 // pred_check_branch
          %131 = sbr.rel (%p129) target = $region24
        $region23: #{tpu_custom_call.1} parent=15 // pred_region
          %s132 = sand.u32 %s50, 1
          %s133 = scalar_lea.sflag [#allocation5], %s132
          %s134 = sand.u32 %s50, 1
          %s135 = smul.addr %s134, 8
          %s136 = scalar_lea.vmem [#allocation4], %s135
          %s138 = ssub.s32 128, 128
          %139 = vsyncadd %s133, %s138
          %s140 = smul.addr %s14, 128
          %s141 = scalar_lea.hbm %s1, %s140
          %s143 = sshll.u32 %s136, 4
          %s144 = int_to_ptr.vmem [resolvable:$true] %s143
          %146 = dma.hbm_to_vmem [thread:$0]  %s141, 128, %s144, %s133
        $region24: #{tpu_custom_call.1} parent=15 // pred_fallthru
          _
      $region16: #{tpu_custom_call.1} parent=5 // pred_fallthru
        _
      %p147 = scmp.le.s32.totalorder 1, %s14
      %p148 = scmp.lt.s32.totalorder %s14, 6
      %p149 = pnand %p147, %p148
      %p150 = pneg %p149
      // Predicated region
      $region25: #{tpu_custom_call.1} parent=5 // pred_check
        _
      $region26: #{tpu_custom_call.1} parent=5 // pred_check_branch
        %152 = sbr.rel (%p149) target = $region28
      $region27: #{tpu_custom_call.1} parent=5 // pred_region
        %s153 = ssub.s32 %s14, 1
        %s154 = sand.u32 %s27, 1
        %s155 = scalar_lea.sflag [#allocation3], %s154
        %s156 = sand.u32 %s27, 1
        %s157 = smul.addr %s156, 8
        %s158 = scalar_lea.vmem [#allocation2], %s157
        // Predicated region
        $region29: #{tpu_custom_call.1} parent=27 // pred_check
          %p159 = pneg %p40
        $region30: #{tpu_custom_call.1} parent=27 // pred_check_branch
          %161 = sbr.rel (%p159) target = $region32
        $region31: #{tpu_custom_call.1} parent=27 // pred_region
          %162 = dma.done %s155, 128
        $region32: #{tpu_custom_call.1} parent=27 // pred_fallthru
          _
        %s163 = sand.u32 %s53, 1
        %s164 = scalar_lea.sflag [#allocation5], %s163
        %s165 = sand.u32 %s53, 1
        %s166 = smul.addr %s165, 8
        %s167 = scalar_lea.vmem [#allocation4], %s166
        // Predicated region
        $region33: #{tpu_custom_call.1} parent=27 // pred_check
          %p168 = pneg %p66
        $region34: #{tpu_custom_call.1} parent=27 // pred_check_branch
          %170 = sbr.rel (%p168) target = $region36
        $region35: #{tpu_custom_call.1} parent=27 // pred_region
          %171 = dma.done %s164, 128
        $region36: #{tpu_custom_call.1} parent=27 // pred_fallthru
          _
        %s172 = sand.u32 %s27, 1
        %s173 = scalar_lea.sflag [#allocation3], %s172
        %s174 = sand.u32 %s27, 1
        %s175 = smul.addr %s174, 8
        %s176 = scalar_lea.vmem [#allocation2], %s175
        %p177 = pneg %p40
        %p178 = pneg %p37
        %s179 = sand.u32 %s53, 1
        %s180 = scalar_lea.sflag [#allocation5], %s179
        %s181 = sand.u32 %s53, 1
        %s182 = smul.addr %s181, 8
        %s183 = scalar_lea.vmem [#allocation4], %s182
        %p184 = pneg %p66
        %p185 = pneg %p63
        %p186 = pneg %p92
        %p187 = pneg %p89
        %p188 = scmp.lt.s32.totalorder %s19, 4
        %s189 = scalar_select %p188, %s19, 4
        %s190 = smul.addr %s189, 8
        %s191 = scalar_lea.vmem %s2, %s190
        %p192 = scmp.lt.s32.totalorder %s19, 4
        %s193 = scalar_select %p192, %s19, 4
        %s194 = smul.addr %s193, 8
        %s195 = scalar_lea.vmem %s2, %s194
        %v196 = vld [vmem:[%s158] sm:$0xff]
        %v197 = vld [vmem:[%s167] sm:$0xff]
        %v198 = vmul.f32 %v196, 0.5
        %v199 = vmul.f32 %v197, 0.5
        %200 = vmax.xlane.f32.xlu0 %v198
        %v201 = vpop.xlane.xlu0 %200
        %v202 = vsub.f32 %v198, %v201
        %203 = vmax.xlane.f32.xlu0 %v199
        %v204 = vpop.xlane.xlu0 %203
        %v205 = vsub.f32 %v199, %v204
        %v206 = vmul.f32 %v202, 1.442695
        %v207 = vpow.pop %v206
        %v208 = vmul.f32 %v205, 1.442695
        %v209 = vpow.pop %v208
        %210 = vadd.xlane.f32.xlu0 %v207
        %v211 = vpop.xlane.xlu0 %210
        %212 = vadd.xlane.f32.xlu0 %v209
        %v213 = vpop.xlane.xlu0 %212
        %v214 = vsub.f32 %v202, %v205
        %v215 = vmul.f32 %v207, %v214
        %216 = vadd.xlane.f32.xlu0 %v215
        %v217 = vpop.xlane.xlu0 %216
        %v218 = vrcp.pop %v211
        %v219 = vmul.f32 %v217, %v218
        %v220 = vlog2.pop %v213
        %v221 = vmul.f32 %v220, 0.6931472
        %v222 = vadd.f32 %v219, %v221
        %v223 = vlog2.pop %v211
        %v224 = vmul.f32 %v223, 0.6931472
        %v225 = vsub.f32 %v222, %v224
        %vm226 = vcmask 7168
        %227 = vst.msk [vmem:[%s195] sm:$0xff] %vm226, %v225
        %p228 = scmp.lt.s32.totalorder %s19, 4
        %s229 = scalar_select %p228, %s19, 4
        %s230 = smul.addr %s229, 8
        %s231 = scalar_lea.vmem %s2, %s230
        // Predicated region
        $region37: #{tpu_custom_call.1} parent=27 // pred_check
          %p232 = pneg %p89
        $region38: #{tpu_custom_call.1} parent=27 // pred_check_branch
          %234 = sbr.rel (%p232) target = $region40
        $region39: #{tpu_custom_call.1} parent=27 // pred_region
          _
        $region40: #{tpu_custom_call.1} parent=27 // pred_fallthru
          _
      $region28: #{tpu_custom_call.1} parent=5 // pred_fallthru
        _
      %p235 = scmp.le.s32.totalorder 2, %s14
      // Predicated region
      $region41: #{tpu_custom_call.1} parent=5 // pred_check
        %p236 = pneg %p235
      $region42: #{tpu_custom_call.1} parent=5 // pred_check_branch
        %238 = sbr.rel (%p236) target = $region44
      $region43: #{tpu_custom_call.1} parent=5 // pred_region
        %s239 = ssub.s32 %s14, 2
        // Predicated region
        $region45: #{tpu_custom_call.1} parent=43 // pred_check
          %p240 = pneg %p95
        $region46: #{tpu_custom_call.1} parent=43 // pred_check_branch
          %242 = sbr.rel (%p240) target = $region48
        $region47: #{tpu_custom_call.1} parent=43 // pred_region
          %p243 = scmp.lt.s32.totalorder %s20, 4
          %s244 = scalar_select %p243, %s20, 4
          %s245 = smul.addr %s244, 8
          %s246 = scalar_lea.vmem %s2, %s245
        $region48: #{tpu_custom_call.1} parent=43 // pred_fallthru
          _
      $region44: #{tpu_custom_call.1} parent=5 // pred_fallthru
        _
    $region6: #{tpu_custom_call.1} parent=1 // loop_footer
      %s18 = sadd.s32 1, %s14
    $region7: #{tpu_custom_call.1} parent=1 // loop_footer_branch
      %13 = sbr.rel target = $region3
    $region8: #{tpu_custom_call.1} parent=1 // loop_exit
      _
    %247 = vsyncpa [#allocation3], 1
    %s248 = scalar_lea.sflag [#allocation3], 1
    %249 = vsyncpa %s248, 1
    %250 = vsyncpa [#allocation5], 1
    %s251 = scalar_lea.sflag [#allocation5], 1
    %252 = vsyncpa %s251, 1

</llo_original>
